<compile_context>
chip_gen: v7x
topology: tpu7x:2x2x1
jax: 0.10.0
libtpu: 0.0.40
codegen_flags: <defaults>
</compile_context>

<pallas_src>
import jax
import jax.numpy as jnp
from jax.experimental import pallas as pl
from jax.experimental.pallas import tpu as pltpu

NEG_SLOPE = 0.2
BN_EPS = 1e-5


def _vmem_limit_bytes(per_step_bytes):
    """Generation-aware scoped-VMEM limit: fit the per-step working set plus headroom,
    capped at 3/4 of physical VMEM (64 MiB v7x, 128 MiB v5e/v6e)."""
    cap = 64 * 1024 * 1024
    try:
        cap = int(getattr(pltpu.get_tpu_info(), "vmem_capacity_bytes", cap))
    except Exception:
        pass
    want = per_step_bytes + (16 << 20)
    return int(min(max(want, 32 << 20), (cap * 3) // 4))


def _pass1_step_vmem_bytes(cin, cout, oh, ow):
    """Per-grid-step VMEM working set: double-buffered pipelined blocks + resident
    weight tile + in-kernel temporaries (patch matrix, f32 accumulator)."""
    k = 16 * cin
    m = oh * ow
    plane = (oh + 1) * ow
    return (2 * cout * k * 2            # resident weight tile (counted double-buffered)
            + 2 * 8 * cin * plane * 2   # input variant-plane block (bf16, x2 buffers)
            + 2 * cout * m * 2          # bf16 y block (x2 buffers)
            + 4 * 2 * cout * 4          # per-image stat blocks
            + 2 * 8 * cin * m * 2       # two sliced tap halves
            + k * m * 2                 # concatenated (K, M) patch matrix
            + 2 * cout * m * 4)         # f32 accumulator + squared temp


def down_conv_block(x, weight, gamma, beta):
    """x: (N, Cin, H, W) f32 NCHW.  weight: (Cout, Cin, 4, 4) f32.  gamma/beta: (Cout,).
    Returns (N, Cout, H/2, W/2) f32."""
    nb, cin, h, w = x.shape
    cout = weight.shape[0]
    assert h % 2 == 0 and w % 2 == 0, "4x4 / stride-2 / pad-1 conv needs even H, W"
    oh, ow = h // 2, w // 2
    m_img = oh * ow            # output pixels per image = lane (M) extent per grid step
    plane = (oh + 1) * ow      # variant-plane length (one extra row for the a=1 taps)
    k = 16 * cin               # exact contraction size (no 128-padding of K)

    # ---------------- wrapper prep (pure layout, fused by XLA) ----------------------
    # LeakyReLU once in f32, cast to the bf16 MXU operand, zero-pad (LeakyReLU(0)==0).
    xa = jnp.where(x > 0, x, NEG_SLOPE * x).astype(jnp.bfloat16)
    xp = jnp.pad(xa, ((0, 0), (0, 0), (1, 1), (1, 1)))               # (N, Cin, H+2, W+2)

    # "Variant planes": for row phase p in {0,1} and column tap dj in {0..3}
    #   plane[p,dj][n, ci, i, c] = xp[n, ci, 2i+p, 2c+dj],  i in [0, OH], c in [0, OW).
    # Each plane is exactly OW wide, so its row-major flatten lines up with the output
    # ordering m = r*OW + c: tap (di=2a+p, dj) is the contiguous lane window
    # [a*OW, a*OW + OH*OW) of the flattened plane.  The kernel therefore builds every
    # tap operand with static contiguous slices only (no strided access, no in-kernel
    # reshape, no 4x im2col in HBM).
    planes = [xp[:, :, p::2, dj:dj + 2 * ow:2]                       # (N, Cin, OH+1, OW)
              for p in range(2) for dj in range(4)]
    xv = jnp.stack(planes, axis=1)                                   # (N, 8, Cin, OH+1, OW)
    xv = xv.reshape(nb, 8 * cin, plane)                              # row (p*4+dj)*Cin+ci, lane i*OW+c

    # Weight as (Cout, K) with k = (di*4 + dj)*Cin + ci  (matches the kernel's K order).
    w_mat = weight.transpose(0, 2, 3, 1).reshape(cout, k).astype(jnp.bfloat16)

    # ---------------- pass 1: conv-as-matmul + per-image BN partial stats -----------
    def conv_stats_kernel(w_ref, x_ref, y_ref, sum_ref, ssq_ref):
        # Rows [0, 8*Cin) of the patch matrix = taps with di in {0,1} (row offset a=0),
        # rows [8*Cin, 16*Cin) = taps with di in {2,3} (row offset a=1 -> lane shift +OW).
        half0 = x_ref[0, :, 0:m_img]                                  # (8*Cin, M) bf16
        half1 = x_ref[0, :, ow:ow + m_img]                            # (8*Cin, M) bf16
        patches = jnp.concatenate([half0, half1], axis=0)             # (K, M) in VMEM only
        y = jnp.dot(w_ref[...], patches,
                    preferred_element_type=jnp.float32)               # (Cout, M) f32 acc
        y_ref[0] = y.astype(y_ref.dtype)                              # bf16 store: halves y HBM bytes
        # Per-image partial sums from the f32 accumulator (cross-lane XLU reductions).
        sum_ref[0] = jnp.sum(y, axis=1, keepdims=True)
        ssq_ref[0] = jnp.sum(y * y, axis=1, keepdims=True)

    vmem_limit = _vmem_limit_bytes(_pass1_step_vmem_bytes(cin, cout, oh, ow))

    y_bf, psum, pssq = pl.pallas_call(
        conv_stats_kernel,
        grid=(nb,),                                                   # one step per image
        in_specs=[
            pl.BlockSpec((cout, k), lambda n: (0, 0)),                # weights: resident
            pl.BlockSpec((1, 8 * cin, plane), lambda n: (n, 0, 0)),   # variant planes
        ],
        out_specs=(
            pl.BlockSpec((1, cout, m_img), lambda n: (n, 0, 0)),      # conv output (bf16)
            pl.BlockSpec((1, cout, 1), lambda n: (n, 0, 0)),          # per-image sum
            pl.BlockSpec((1, cout, 1), lambda n: (n, 0, 0)),          # per-image sumsq
        ),
        out_shape=(
            jax.ShapeDtypeStruct((nb, cout, m_img), jnp.bfloat16),
            jax.ShapeDtypeStruct((nb, cout, 1), jnp.float32),
            jax.ShapeDtypeStruct((nb, cout, 1), jnp.float32),
        ),
        compiler_params=pltpu.CompilerParams(
            # No cross-step accumulator (stats are per-image partials), so the batch
            # axis is truly parallel -> v7x megacore shards it across both TensorCores.
            dimension_semantics=("parallel",),
            vmem_limit_bytes=vmem_limit),
    )(w_mat, xv)

    # ---------------- global BN stats + fused affine epilogue (XLA) -----------------
    m_total = float(nb * m_img)
    ysum = jnp.sum(psum, axis=0)                                      # (Cout, 1)
    yssq = jnp.sum(pssq, axis=0)
    mean = ysum / m_total
    var = jnp.maximum(yssq / m_total - mean * mean, 0.0)              # biased var (training BN)
    inv_std = jax.lax.rsqrt(var + BN_EPS)
    scale = gamma.reshape(cout, 1) * inv_std
    shift = beta.reshape(cout, 1) - mean * scale
    # One elementwise XLA pass fused with the bf16->f32 cast; the kernel output is
    # already in NCHW-flat order, so the reshape below is free (no transpose pass).
    out = y_bf.astype(jnp.float32) * scale[None] + shift[None]        # (N, Cout, OH*OW)
    return out.reshape(nb, cout, oh, ow)


def _reference(x, weight, gamma, beta):
    """Pure-JAX reference with the same bf16 matmul operands (f32 accumulation)."""
    xa = jnp.where(x > 0, x, NEG_SLOPE * x)
    y = jax.lax.conv_general_dilated(
        xa.astype(jnp.bfloat16), weight.astype(jnp.bfloat16),
        window_strides=(2, 2), padding=((1, 1), (1, 1)),
        dimension_numbers=("NCHW", "OIHW", "NCHW"),
        preferred_element_type=jnp.float32)
    mean = jnp.mean(y, axis=(0, 2, 3), keepdims=True)
    var = jnp.mean(jnp.square(y - mean), axis=(0, 2, 3), keepdims=True)
    return ((y - mean) * jax.lax.rsqrt(var + BN_EPS) * gamma.reshape(1, -1, 1, 1)
            + beta.reshape(1, -1, 1, 1))


if __name__ == "__main__":
    key = jax.random.PRNGKey(0)
    kx, kw, kg, kb, kx2 = jax.random.split(key, 5)

    N, CIN, H, W = 2, 4, 16, 16
    COUT = 8

    # Primary check: fresh-module BatchNorm init (gamma=1, beta=0).
    x = jax.random.normal(kx, (N, CIN, H, W), dtype=jnp.float32)
    weight = 0.1 * jax.random.normal(kw, (COUT, CIN, 4, 4), dtype=jnp.float32)
    gamma = jnp.ones((COUT,), dtype=jnp.float32)
    beta = jnp.zeros((COUT,), dtype=jnp.float32)

    y_out = down_conv_block(x, weight, gamma, beta)
    jax.block_until_ready(y_out)
    assert y_out.shape == (N, COUT, H // 2, W // 2)
    y_ref = _reference(x, weight, gamma, beta)
    assert bool(jnp.allclose(y_out, y_ref, atol=3e-2, rtol=3e-2)), \
        float(jnp.max(jnp.abs(y_out - y_ref)))

    # Second check: larger spatial, odd batch (multi-step grid, per-image partial-stat
    # combine path), non-default affine parameters.
    N2, H2, W2 = 3, 32, 32
    x2 = jax.random.normal(kx2, (N2, CIN, H2, W2), dtype=jnp.float32)
    gamma2 = 1.0 + 0.1 * jax.random.normal(kg, (COUT,), dtype=jnp.float32)
    beta2 = 0.1 * jax.random.normal(kb, (COUT,), dtype=jnp.float32)
    y2_out = down_conv_block(x2, weight, gamma2, beta2)
    jax.block_until_ready(y2_out)
    assert y2_out.shape == (N2, COUT, H2 // 2, W2 // 2)
    y2_ref = _reference(x2, weight, gamma2, beta2)
    assert bool(jnp.allclose(y2_out, y2_ref, atol=3e-2, rtol=3e-2)), \
        float(jnp.max(jnp.abs(y2_out - y2_ref)))

    print("KERNEL_OK")
</pallas_src>

<mosaic_0001>
module attributes {stable_mosaic.version = 11 : i64} {
  func.func @conv_stats_kernel(%arg0: i32, %arg1: memref<8x64xbf16, #tpu.memory_space<vmem>>, %arg2: memref<1x32x72xbf16, #tpu.memory_space<vmem>>, %arg3: memref<1x8x64xbf16, #tpu.memory_space<vmem>>, %arg4: memref<1x8x1xf32, #tpu.memory_space<vmem>>, %arg5: memref<1x8x1xf32, #tpu.memory_space<vmem>>) attributes {dimension_semantics = [#tpu.dimension_semantics<parallel>], iteration_bounds = array<i64: 2>, scalar_prefetch = 0 : i64, scratch_operands = 0 : i64, tpu.core_type = #tpu.core_type<tc>, window_params = [{pipeline_mode = #tpu.pipeline_mode<synchronous>, transform_indices = @transform_0, window_bounds = array<i64: 8, 64>}, {transform_indices = @transform_1, window_bounds = array<i64: 1, 32, 72>}, {transform_indices = @transform_2, window_bounds = array<i64: 1, 8, 64>}, {transform_indices = @transform_3, window_bounds = array<i64: 1, 8, 1>}, {transform_indices = @transform_4, window_bounds = array<i64: 1, 8, 1>}]} {
    %c0 = arith.constant 0 : index
    %c0_0 = arith.constant 0 : index
    %c0_1 = arith.constant 0 : index
    %0 = vector.load %arg2[%c0, %c0_0, %c0_1] : memref<1x32x72xbf16, #tpu.memory_space<vmem>>, vector<1x32x64xbf16>
    %1 = vector.shape_cast %0 : vector<1x32x64xbf16> to vector<32x64xbf16>
    %c0_2 = arith.constant 0 : index
    %c0_3 = arith.constant 0 : index
    %c8 = arith.constant 8 : index
    %2 = vector.load %arg2[%c0_2, %c0_3, %c8] : memref<1x32x72xbf16, #tpu.memory_space<vmem>>, vector<1x32x64xbf16>
    %3 = vector.shape_cast %2 : vector<1x32x64xbf16> to vector<32x64xbf16>
    %4 = tpu.concatenate %1, %3 in 0 : vector<32x64xbf16>, vector<32x64xbf16> -> vector<64x64xbf16>
    %c0_4 = arith.constant 0 : index
    %c0_5 = arith.constant 0 : index
    %5 = vector.load %arg1[%c0_4, %c0_5] : memref<8x64xbf16, #tpu.memory_space<vmem>>, vector<8x64xbf16>
    %cst = arith.constant dense<0.000000e+00> : vector<8x64xf32>
    %6 = tpu.matmul %5, %4, %cst {dimension_numbers = #tpu.dot_dimension_numbers<[1], [0], [0], [1], [0, 0, 1, 1], [], []>} : vector<8x64xbf16>, vector<64x64xbf16>, vector<8x64xf32> -> vector<8x64xf32>
    %7 = arith.truncf %6 : vector<8x64xf32> to vector<8x64xbf16>
    %c0_6 = arith.constant 0 : index
    %c0_7 = arith.constant 0 : index
    %c0_8 = arith.constant 0 : index
    %8 = vector.load %arg3[%c0_6, %c0_7, %c0_8] : memref<1x8x64xbf16, #tpu.memory_space<vmem>>, vector<1x8x64xbf16>
    %9 = vector.shape_cast %8 : vector<1x8x64xbf16> to vector<8x64xbf16>
    %10 = vector.shape_cast %7 : vector<8x64xbf16> to vector<1x8x64xbf16>
    tpu.vector_store %arg3[%c0_6, %c0_7, %c0_8], %10 {strides = array<i32>} : memref<1x8x64xbf16, #tpu.memory_space<vmem>>, vector<1x8x64xbf16>,
    %cst_9 = arith.constant dense<0.000000e+00> : vector<8xf32>
    %11 = vector.multi_reduction <add>, %6, %cst_9 [1] : vector<8x64xf32> to vector<8xf32>
    %12 = vector.shape_cast %11 : vector<8xf32> to vector<8x1xf32>
    %c0_10 = arith.constant 0 : index
    %c0_11 = arith.constant 0 : index
    %c0_12 = arith.constant 0 : index
    %13 = vector.load %arg4[%c0_10, %c0_11, %c0_12] : memref<1x8x1xf32, #tpu.memory_space<vmem>>, vector<1x8x1xf32>
    %14 = vector.shape_cast %13 : vector<1x8x1xf32> to vector<8x1xf32>
    %15 = vector.shape_cast %12 : vector<8x1xf32> to vector<1x8x1xf32>
    tpu.vector_store %arg4[%c0_10, %c0_11, %c0_12], %15 {strides = array<i32>} : memref<1x8x1xf32, #tpu.memory_space<vmem>>, vector<1x8x1xf32>,
    %16 = arith.mulf %6, %6 : vector<8x64xf32>
    %cst_13 = arith.constant dense<0.000000e+00> : vector<8xf32>
    %17 = vector.multi_reduction <add>, %16, %cst_13 [1] : vector<8x64xf32> to vector<8xf32>
    %18 = vector.shape_cast %17 : vector<8xf32> to vector<8x1xf32>
    %c0_14 = arith.constant 0 : index
    %c0_15 = arith.constant 0 : index
    %c0_16 = arith.constant 0 : index
    %19 = vector.load %arg5[%c0_14, %c0_15, %c0_16] : memref<1x8x1xf32, #tpu.memory_space<vmem>>, vector<1x8x1xf32>
    %20 = vector.shape_cast %19 : vector<1x8x1xf32> to vector<8x1xf32>
    %21 = vector.shape_cast %18 : vector<8x1xf32> to vector<1x8x1xf32>
    tpu.vector_store %arg5[%c0_14, %c0_15, %c0_16], %21 {strides = array<i32>} : memref<1x8x1xf32, #tpu.memory_space<vmem>>, vector<1x8x1xf32>,
    return
  }
  func.func @transform_0(%arg0: i32) -> (i32, i32) {
    %c0_i32 = arith.constant 0 : i32
    %c0_i32_0 = arith.constant 0 : i32
    %c0_i32_1 = arith.constant 0 : i32
    return %c0_i32, %c0_i32_0 : i32, i32
  }
  func.func @transform_1(%arg0: i32) -> (i32, i32, i32) {
    %c0_i32 = arith.constant 0 : i32
    %c0_i32_0 = arith.constant 0 : i32
    %c0_i32_1 = arith.constant 0 : i32
    return %arg0, %c0_i32, %c0_i32_0 : i32, i32, i32
  }
  func.func @transform_2(%arg0: i32) -> (i32, i32, i32) {
    %c0_i32 = arith.constant 0 : i32
    %c0_i32_0 = arith.constant 0 : i32
    %c0_i32_1 = arith.constant 0 : i32
    return %arg0, %c0_i32, %c0_i32_0 : i32, i32, i32
  }
  func.func @transform_3(%arg0: i32) -> (i32, i32, i32) {
    %c0_i32 = arith.constant 0 : i32
    %c0_i32_0 = arith.constant 0 : i32
    %c0_i32_1 = arith.constant 0 : i32
    return %arg0, %c0_i32, %c0_i32_0 : i32, i32, i32
  }
  func.func @transform_4(%arg0: i32) -> (i32, i32, i32) {
    %c0_i32 = arith.constant 0 : i32
    %c0_i32_0 = arith.constant 0 : i32
    %c0_i32_1 = arith.constant 0 : i32
    return %arg0, %c0_i32, %c0_i32_0 : i32, i32, i32
  }
}

</mosaic_0001>

<llo_original>
// kernel: tpu_custom_call.1
$region0: #{tpu_custom_call.1}
  #allocation0 [shape = 'u32[]', space=smem, size = 0x4, offset = 0x4, fixed_abs, tag = 'smem constant byte address 0x4 - core index']
  #allocation1 [shape = 'u32[144,128]{1,0:T(1,128)}', space=vmem, size = 0x12000, scoped, tag = 'internal scratch']
  %s0 = inlined_call_operand.hbm [shape: bf16[8,64], index: 0, kind: input, shape index: {}]
  %s1 = inlined_call_operand.hbm [shape: bf16[2,32,72], index: 1, kind: input, shape index: {}]
  %s2 = inlined_call_operand.hbm [shape: bf16[2,8,64], index: 2, kind: output, shape index: {0}]
  %s3 = inlined_call_operand.vmem [shape: f32[2,8,1], index: 3, kind: output, shape index: {1}]
  %s4 = inlined_call_operand.vmem [shape: f32[2,8,1], index: 4, kind: output, shape index: {2}]
  %5 = xla_tuple %s2, %s3, %s4
  %s6 = sld [smem:[#allocation0]]
  $region65: #{tpu_custom_call.1} parent=0
    _
  %s8 = ssub.s32 1, %s6
  %s9 = scalar_select 0, %s8, %s6
  $region1: #{tpu_custom_call.1} parent=0
    #allocation2 [shape = 'u8[2048]{0}', space=vmem, size = 0x800, scoped, tag = 'input window, operand 0, single buffered']
    #allocation3 [shape = 's32[2]{0}', space=sflag, size = 0x8, scoped, tag = 'scoped memory for tpu_custom_call.1']
    #allocation4 [shape = 's32[2]{0}', space=sflag, size = 0x8, scoped, tag = 'scoped memory for tpu_custom_call.1']
    #allocation5 [shape = 'u8[16384]{0}', space=vmem, size = 0x4000, scoped, tag = 'input window, operand 1']
    #allocation6 [shape = 's32[2]{0}', space=sflag, size = 0x8, scoped, tag = 'scoped memory for tpu_custom_call.1']
    #allocation7 [shape = 'u8[4096]{0}', space=vmem, size = 0x1000, scoped, tag = 'output window, operand 0']
    %10 = vsyncpa [#allocation3], 0
    %11 = vsyncpa [#allocation6], 0
    %s12 = scalar_lea.sflag [#allocation6], 1
    %13 = vsyncpa %s12, 0
    %14 = vsyncpa [#allocation4], 0
    %s15 = scalar_lea.sflag [#allocation4], 1
    %16 = vsyncpa %s15, 0
    loop: start=0, step=1, limit=4
    $region2: #{tpu_custom_call.1} parent=1 // loop_pre_header
      _
    $region3: #{tpu_custom_call.1} parent=1 // loop_header
      %s18 = sphi 0, %s22
      %p19 = scmp.ge.s32.totalorder %s18, 4
      %s26 = sphi 0, %s26
      %s28 = sphi 0, %s26
      %s29 = sphi 0, %s28
      %s43 = sphi 0, %s29
      %s49 = sphi 0, %s51
      %s52 = sphi 0, %s49
      %s53 = sphi 0, %s52
      %s69 = sphi 0, %s53
      %s75 = sphi 0, %s77
      %s78 = sphi 0, %s75
      %s79 = sphi 0, %s78
      %s95 = sphi 0, %s79
      %s101 = sphi 0, %s103
      %s104 = sphi 0, %s101
      %s105 = sphi 0, %s104
      %s121 = sphi 0, %s105
      %s127 = sphi 0, %s129
      %s130 = sphi 0, %s127
      %s131 = sphi 0, %s130
      %s147 = sphi 0, %s131
    $region4: #{tpu_custom_call.1} parent=1 // loop_header_branch
      %21 = sbr.rel (%p19) target = $region8
    $region5: #{tpu_custom_call.1} parent=1 // loop_body
      %s23 = ssub.s32 %s18, 1
      %s24 = ssub.s32 %s18, 2
      %s25 = sadd.s32 %s18, 1
      %s27 = sadd.s32 %s26, 1
      %p30 = scmp.eq.s32.totalorder %s18, 1
      %p31 = scmp.ne.s32.totalorder %s26, %s28
      %p32 = scmp.eq.s32.totalorder %s18, 0
      %p33 = por %p31, %p32
      %p34 = scmp.ne.s32.totalorder %s26, %s28
      %p35 = scmp.eq.s32.totalorder %s23, 1
      %p36 = por %p34, %p35
      %p37 = scmp.ne.s32.totalorder %s28, %s29
      %p38 = scmp.eq.s32.totalorder %s23, 0
      %p39 = por %p37, %p38
      %p40 = scmp.ne.s32.totalorder %s28, %s29
      %p41 = scmp.eq.s32.totalorder %s24, 1
      %p42 = por %p40, %p41
      %p44 = scmp.ne.s32.totalorder %s29, %s43
      %p45 = scmp.eq.s32.totalorder %s24, 0
      %p46 = por %p44, %p45
      %s47 = ssub.s32 %s18, %s25
      %p48 = scmp.eq.s32.totalorder %s47, 0
      %s50 = sadd.s32 %s49, 1
      %s51 = scalar_select %p48, %s49, %s50
      %p54 = pneg %p48
      %p55 = scmp.eq.s32.totalorder %s18, 1
      %p56 = por %p54, %p55
      %p57 = scmp.ne.s32.totalorder %s49, %s52
      %p58 = scmp.eq.s32.totalorder %s18, 0
      %p59 = por %p57, %p58
      %p60 = scmp.ne.s32.totalorder %s49, %s52
      %p61 = scmp.eq.s32.totalorder %s23, 1
      %p62 = por %p60, %p61
      %p63 = scmp.ne.s32.totalorder %s52, %s53
      %p64 = scmp.eq.s32.totalorder %s23, 0
      %p65 = por %p63, %p64
      %p66 = scmp.ne.s32.totalorder %s52, %s53
      %p67 = scmp.eq.s32.totalorder %s24, 1
      %p68 = por %p66, %p67
      %p70 = scmp.ne.s32.totalorder %s53, %s69
      %p71 = scmp.eq.s32.totalorder %s24, 0
      %p72 = por %p70, %p71
      %s73 = ssub.s32 %s18, %s25
      %p74 = scmp.eq.s32.totalorder %s73, 0
      %s76 = sadd.s32 %s75, 1
      %s77 = scalar_select %p74, %s75, %s76
      %p80 = pneg %p74
      %p81 = scmp.eq.s32.totalorder %s18, 1
      %p82 = por %p80, %p81
      %p83 = scmp.ne.s32.totalorder %s75, %s78
      %p84 = scmp.eq.s32.totalorder %s18, 0
      %p85 = por %p83, %p84
      %p86 = scmp.ne.s32.totalorder %s75, %s78
      %p87 = scmp.eq.s32.totalorder %s23, 1
      %p88 = por %p86, %p87
      %p89 = scmp.ne.s32.totalorder %s78, %s79
      %p90 = scmp.eq.s32.totalorder %s23, 0
      %p91 = por %p89, %p90
      %p92 = scmp.ne.s32.totalorder %s78, %s79
      %p93 = scmp.eq.s32.totalorder %s24, 1
      %p94 = por %p92, %p93
      %p96 = scmp.ne.s32.totalorder %s79, %s95
      %p97 = scmp.eq.s32.totalorder %s24, 0
      %p98 = por %p96, %p97
      %s99 = ssub.s32 %s18, %s25
      %p100 = scmp.eq.s32.totalorder %s99, 0
      %s102 = sadd.s32 %s101, 1
      %s103 = scalar_select %p100, %s101, %s102
      %p106 = pneg %p100
      %p107 = scmp.eq.s32.totalorder %s18, 1
      %p108 = por %p106, %p107
      %p109 = scmp.ne.s32.totalorder %s101, %s104
      %p110 = scmp.eq.s32.totalorder %s18, 0
      %p111 = por %p109, %p110
      %p112 = scmp.ne.s32.totalorder %s101, %s104
      %p113 = scmp.eq.s32.totalorder %s23, 1
      %p114 = por %p112, %p113
      %p115 = scmp.ne.s32.totalorder %s104, %s105
      %p116 = scmp.eq.s32.totalorder %s23, 0
      %p117 = por %p115, %p116
      %p118 = scmp.ne.s32.totalorder %s104, %s105
      %p119 = scmp.eq.s32.totalorder %s24, 1
      %p120 = por %p118, %p119
      %p122 = scmp.ne.s32.totalorder %s105, %s121
      %p123 = scmp.eq.s32.totalorder %s24, 0
      %p124 = por %p122, %p123
      %s125 = ssub.s32 %s18, %s25
      %p126 = scmp.eq.s32.totalorder %s125, 0
      %s128 = sadd.s32 %s127, 1
      %s129 = scalar_select %p126, %s127, %s128
      %p132 = pneg %p126
      %p133 = scmp.eq.s32.totalorder %s18, 1
      %p134 = por %p132, %p133
      %p135 = scmp.ne.s32.totalorder %s127, %s130
      %p136 = scmp.eq.s32.totalorder %s18, 0
      %p137 = por %p135, %p136
      %p138 = scmp.ne.s32.totalorder %s127, %s130
      %p139 = scmp.eq.s32.totalorder %s23, 1
      %p140 = por %p138, %p139
      %p141 = scmp.ne.s32.totalorder %s130, %s131
      %p142 = scmp.eq.s32.totalorder %s23, 0
      %p143 = por %p141, %p142
      %p144 = scmp.ne.s32.totalorder %s130, %s131
      %p145 = scmp.eq.s32.totalorder %s24, 1
      %p146 = por %p144, %p145
      %p148 = scmp.ne.s32.totalorder %s131, %s147
      %p149 = scmp.eq.s32.totalorder %s24, 0
      %p150 = por %p148, %p149
      %p151 = scmp.le.s32.totalorder 1, %s18
      %p152 = scmp.lt.s32.totalorder %s18, 3
      %p153 = pnand %p151, %p152
      %p154 = pneg %p153
      // Predicated region
      $region9: #{tpu_custom_call.1} parent=5 // pred_check
        _
      $region10: #{tpu_custom_call.1} parent=5 // pred_check_branch
        %156 = sbr.rel (%p153) target = $region12
      $region11: #{tpu_custom_call.1} parent=5 // pred_region
        %s157 = ssub.s32 %s18, 1
        // Predicated region
        $region13: #{tpu_custom_call.1} parent=11 // pred_check
          %p158 = pneg %p39
        $region14: #{tpu_custom_call.1} parent=11 // pred_check_branch
          %160 = sbr.rel (%p158) target = $region16
        $region15: #{tpu_custom_call.1} parent=11 // pred_region
          %s162 = ssub.s32 64, 64
          %163 = vsyncadd [#allocation3], %s162
          %s165 = sshll.u32 [#allocation2], 4
          %s166 = int_to_ptr.vmem [resolvable:$true] %s165
          %168 = dma.hbm_to_vmem [thread:$0]  %s0, 64, %s166, [#allocation3]
        $region16: #{tpu_custom_call.1} parent=11 // pred_fallthru
          _
      $region12: #{tpu_custom_call.1} parent=5 // pred_fallthru
        _
      %p169 = scmp.lt.s32.totalorder %s18, 2
      // Predicated region
      $region17: #{tpu_custom_call.1} parent=5 // pred_check
        %p170 = pneg %p169
      $region18: #{tpu_custom_call.1} parent=5 // pred_check_branch
        %172 = sbr.rel (%p170) target = $region20
      $region19: #{tpu_custom_call.1} parent=5 // pred_region
        // Predicated region
        $region21: #{tpu_custom_call.1} parent=19 // pred_check
          %p173 = pneg %p59
        $region22: #{tpu_custom_call.1} parent=19 // pred_check_branch
          %175 = sbr.rel (%p173) target = $region24
        $region23: #{tpu_custom_call.1} parent=19 // pred_region
          %s176 = sand.u32 %s49, 1
          %s177 = scalar_lea.sflag [#allocation6], %s176
          %s178 = sand.u32 %s49, 1
          %s179 = smul.addr %s178, 16
          %s180 = scalar_lea.vmem [#allocation5], %s179
          %s182 = ssub.s32 256, 256
          %183 = vsyncadd %s177, %s182
          %s184 = smul.addr %s18, 4
          %s185 = smul.addr %s184, 64
          %s186 = scalar_lea.hbm %s1, %s185
          %s187 = sshll.u32 %s180, 4
          %s188 = int_to_ptr.vmem [resolvable:$true] %s187
          %193 = dma.hbm_to_vmem [thread:$0]  %s186, 256, %s188, %s177, 64, 64, 4
        $region24: #{tpu_custom_call.1} parent=19 // pred_fallthru
          _
      $region20: #{tpu_custom_call.1} parent=5 // pred_fallthru
        _
      %p194 = scmp.le.s32.totalorder 1, %s18
      %p195 = scmp.lt.s32.totalorder %s18, 3
      %p196 = pnand %p194, %p195
      %p197 = pneg %p196
      // Predicated region
      $region25: #{tpu_custom_call.1} parent=5 // pred_check
        _
      $region26: #{tpu_custom_call.1} parent=5 // pred_check_branch
        %199 = sbr.rel (%p196) target = $region28
      $region27: #{tpu_custom_call.1} parent=5 // pred_region
        %s200 = ssub.s32 %s18, 1
        // Predicated region
        $region29: #{tpu_custom_call.1} parent=27 // pred_check
          %p201 = pneg %p39
        $region30: #{tpu_custom_call.1} parent=27 // pred_check_branch
          %203 = sbr.rel (%p201) target = $region32
        $region31: #{tpu_custom_call.1} parent=27 // pred_region
          %204 = dma.done [#allocation3], 64
        $region32: #{tpu_custom_call.1} parent=27 // pred_fallthru
          _
        %s205 = sand.u32 %s52, 1
        %s206 = scalar_lea.sflag [#allocation6], %s205
        %s207 = sand.u32 %s52, 1
        %s208 = smul.addr %s207, 16
        %s209 = scalar_lea.vmem [#allocation5], %s208
        // Predicated region
        $region33: #{tpu_custom_call.1} parent=27 // pred_check
          %p210 = pneg %p65
        $region34: #{tpu_custom_call.1} parent=27 // pred_check_branch
          %212 = sbr.rel (%p210) target = $region36
        $region35: #{tpu_custom_call.1} parent=27 // pred_region
          %213 = dma.done %s206, 256
        $region36: #{tpu_custom_call.1} parent=27 // pred_fallthru
          _
        %p214 = pneg %p39
        %p215 = pneg %p36
        %s216 = sand.u32 %s52, 1
        %s217 = scalar_lea.sflag [#allocation6], %s216
        %s218 = sand.u32 %s52, 1
        %s219 = smul.addr %s218, 16
        %s220 = scalar_lea.vmem [#allocation5], %s219
        %p221 = pneg %p65
        %p222 = pneg %p62
        %p223 = pneg %p91
        %p224 = pneg %p88
        %s225 = sand.u32 %s78, 1
        %s226 = scalar_lea.sflag [#allocation4], %s225
        %s227 = sand.u32 %s78, 1
        %s228 = smul.addr %s227, 4
        %s229 = scalar_lea.vmem [#allocation7], %s228
        %p230 = pneg %p117
        %p231 = pneg %p114
        %p232 = scmp.lt.s32.totalorder %s23, 1
        %s233 = scalar_select %p232, %s23, 1
        %s234 = smul.addr %s233, 8
        %s235 = scalar_lea.vmem %s3, %s234
        %p236 = pneg %p143
        %p237 = pneg %p140
        %p238 = scmp.lt.s32.totalorder %s23, 1
        %s239 = scalar_select %p238, %s23, 1
        %s240 = smul.addr %s239, 8
        %s241 = scalar_lea.vmem %s4, %s240
        %p242 = scmp.lt.s32.totalorder %s23, 1
        %s243 = scalar_select %p242, %s23, 1
        %s244 = smul.addr %s243, 8
        %s245 = scalar_lea.vmem %s3, %s244
        %p246 = scmp.lt.s32.totalorder %s23, 1
        %s247 = scalar_select %p246, %s23, 1
        %s248 = smul.addr %s247, 8
        %s249 = scalar_lea.vmem %s4, %s248
        %v251 = vld [vmem:[%s209] sm:$0xf]
        %v252 = vld [vmem:[%s209 + $0x4] sm:$0xf]
        %v253 = vld [vmem:[%s209 + $0x8] sm:$0xf]
        %v254 = vld [vmem:[%s209 + $0xc] sm:$0xf]
        %v259 = vunpack.c.l.b16 %v251
        %v260 = vunpack.c.l.b16 %v252
        %v261 = vunpack.c.l.b16 %v253
        %v262 = vunpack.c.l.b16 %v254
        %v263 = vpack.c.b16 %v260, %v259
        %v264 = vpack.c.b16 %v262, %v261
        %267 = vrot.lane.b32.xlu0 %v263, 120
        %v268 = vpop.permute.xlu0 %267
        %269 = vrot.lane.b32.xlu0 %v264, 120
        %v270 = vpop.permute.xlu0 %269
        %v273 = vld [vmem:[#allocation2] sm:$0xf]
        %vm274 = vcmask 523264
        %v276 = vsel %vm274, %v273, 0
        %278 = vmatprep.subr.bf16.mxu0 0
        %279 = vmatpush1.bf16.msra.mxu0 %v263
        %280 = vmatprep.subr.bf16.mxu0 0
        %281 = vmatpush1.bf16.msra.mxu0 %v264
        %282 = vmatprep.subr.bf16.mxu0 0
        %283 = vmatpush1.bf16.msra.mxu0 %v268
        %284 = vmatprep.subr.bf16.mxu0 0
        %285 = vmatpush1.bf16.msra.mxu0 %v270
        %286 = vmatprep.subr.bf16.mxu0 0
        %287 = vmatpush1.bf16.msra.mxu0 0
        %288 = vmatprep.subr.bf16.mxu0 0
        %289 = vmatpush1.bf16.msra.mxu0 0
        %290 = vmatprep.subr.bf16.mxu0 0
        %291 = vmatpush1.bf16.msra.mxu0 0
        %292 = vmatprep.subr.bf16.mxu0 0
        %293 = vmatpush1.bf16.msra.mxu0 0
        %294 = vmatprep.subr.bf16.mxu0 0
        %295 = vmatpush1.bf16.msra.mxu0 0
        %296 = vmatprep.subr.bf16.mxu0 0
        %297 = vmatpush1.bf16.msra.mxu0 0
        %298 = vmatprep.subr.bf16.mxu0 0
        %299 = vmatpush1.bf16.msra.mxu0 0
        %300 = vmatprep.subr.bf16.mxu0 0
        %301 = vmatpush1.bf16.msra.mxu0 0
        %302 = vmatprep.subr.bf16.mxu0 0
        %303 = vmatpush1.bf16.msra.mxu0 0
        %304 = vmatprep.subr.bf16.mxu0 0
        %305 = vmatpush1.bf16.msra.mxu0 0
        %306 = vmatprep.subr.bf16.mxu0 0
        %307 = vmatpush1.bf16.msra.mxu0 0
        %308 = vmatprep.subr.bf16.mxu0 0
        %309 = vmatpush1.bf16.msra.mxu0 0
        %310 = vmatprep.mubr.bf16.mxu0 0
        %311 = vmatmul.mubr.bf16.gmra.mrb[0].mxu0 %v276
        %v312 = vpop.f32.mrb[0].mxu0
        %v313 = vadd.f32 0.0, %v312
        %v314 = vpop.f32.mrb[0].mxu0
        %v315 = vpop.f32.mrb[0].mxu0
        %v316 = vpop.f32.mrb[0].mxu0
        %317 = vdwg.mxu0
        %v318 = vpack.c.bf16 %v313, %v313
        %vm319 = vcmask 519168
        %320 = vst.msk [vmem:[%s229] sm:$0xf] %vm319, %v318
        %v321 = vsel %vm274, %v313, 0.0
        %322 = vadd.xlane.f32.xlu0 %v321
        %v323 = vpop.xlane.xlu0 %322
        %vm324 = vcmask 7168
        %325 = vst.msk [vmem:[%s245] sm:$0xff] %vm324, %v323
        %v326 = vmul.f32 %v313, %v313
        %v327 = vsel %vm274, %v326, 0.0
        %328 = vadd.xlane.f32.xlu0 %v327
        %v329 = vpop.xlane.xlu0 %328
        %330 = vst.msk [vmem:[%s249] sm:$0xff] %vm324, %v329
        %s331 = sand.u32 %s78, 1
        %s332 = scalar_lea.sflag [#allocation4], %s331
        %s333 = sand.u32 %s78, 1
        %s334 = smul.addr %s333, 4
        %s335 = scalar_lea.vmem [#allocation7], %s334
        %p336 = scmp.lt.s32.totalorder %s23, 1
        %s337 = scalar_select %p336, %s23, 1
        %s338 = smul.addr %s337, 8
        %s339 = scalar_lea.vmem %s3, %s338
        %p340 = scmp.lt.s32.totalorder %s23, 1
        %s341 = scalar_select %p340, %s23, 1
        %s342 = smul.addr %s341, 8
        %s343 = scalar_lea.vmem %s4, %s342
        // Predicated region
        $region37: #{tpu_custom_call.1} parent=27 // pred_check
          %p344 = pneg %p88
        $region38: #{tpu_custom_call.1} parent=27 // pred_check_branch
          %346 = sbr.rel (%p344) target = $region40
        $region39: #{tpu_custom_call.1} parent=27 // pred_region
          %s348 = ssub.s32 64, 64
          %349 = vsyncadd %s332, %s348
          %s350 = smul.addr %s23, 64
          %s351 = scalar_lea.hbm %s2, %s350
          %s353 = sshll.u32 %s335, 4
          %s354 = int_to_ptr.vmem [resolvable:$true] %s353
          %356 = dma.vmem_to_hbm [thread:$0]  %s354, 64, %s351, %s332
        $region40: #{tpu_custom_call.1} parent=27 // pred_fallthru
          _
        // Predicated region
        $region41: #{tpu_custom_call.1} parent=27 // pred_check
          %p357 = pneg %p114
        $region42: #{tpu_custom_call.1} parent=27 // pred_check_branch
          %359 = sbr.rel (%p357) target = $region44
        $region43: #{tpu_custom_call.1} parent=27 // pred_region
          _
        $region44: #{tpu_custom_call.1} parent=27 // pred_fallthru
          _
        // Predicated region
        $region45: #{tpu_custom_call.1} parent=27 // pred_check
          %p360 = pneg %p140
        $region46: #{tpu_custom_call.1} parent=27 // pred_check_branch
          %362 = sbr.rel (%p360) target = $region48
        $region47: #{tpu_custom_call.1} parent=27 // pred_region
          _
        $region48: #{tpu_custom_call.1} parent=27 // pred_fallthru
          _
      $region28: #{tpu_custom_call.1} parent=5 // pred_fallthru
        _
      %p363 = scmp.le.s32.totalorder 2, %s18
      // Predicated region
      $region49: #{tpu_custom_call.1} parent=5 // pred_check
        %p364 = pneg %p363
      $region50: #{tpu_custom_call.1} parent=5 // pred_check_branch
        %366 = sbr.rel (%p364) target = $region52
      $region51: #{tpu_custom_call.1} parent=5 // pred_region
        %s367 = ssub.s32 %s18, 2
        // Predicated region
        $region53: #{tpu_custom_call.1} parent=51 // pred_check
          %p368 = pneg %p94
        $region54: #{tpu_custom_call.1} parent=51 // pred_check_branch
          %370 = sbr.rel (%p368) target = $region56
        $region55: #{tpu_custom_call.1} parent=51 // pred_region
          %s371 = sand.u32 %s79, 1
          %s372 = scalar_lea.sflag [#allocation4], %s371
          %s373 = sand.u32 %s79, 1
          %s374 = smul.addr %s373, 4
          %s375 = scalar_lea.vmem [#allocation7], %s374
          %376 = dma.done %s372, 64
        $region56: #{tpu_custom_call.1} parent=51 // pred_fallthru
          _
        // Predicated region
        $region57: #{tpu_custom_call.1} parent=51 // pred_check
          %p377 = pneg %p120
        $region58: #{tpu_custom_call.1} parent=51 // pred_check_branch
          %379 = sbr.rel (%p377) target = $region60
        $region59: #{tpu_custom_call.1} parent=51 // pred_region
          %p380 = scmp.lt.s32.totalorder %s24, 1
          %s381 = scalar_select %p380, %s24, 1
          %s382 = smul.addr %s381, 8
          %s383 = scalar_lea.vmem %s3, %s382
        $region60: #{tpu_custom_call.1} parent=51 // pred_fallthru
          _
        // Predicated region
        $region61: #{tpu_custom_call.1} parent=51 // pred_check
          %p384 = pneg %p146
        $region62: #{tpu_custom_call.1} parent=51 // pred_check_branch
          %386 = sbr.rel (%p384) target = $region64
        $region63: #{tpu_custom_call.1} parent=51 // pred_region
          %p387 = scmp.lt.s32.totalorder %s24, 1
          %s388 = scalar_select %p387, %s24, 1
          %s389 = smul.addr %s388, 8
          %s390 = scalar_lea.vmem %s4, %s389
        $region64: #{tpu_custom_call.1} parent=51 // pred_fallthru
          _
      $region52: #{tpu_custom_call.1} parent=5 // pred_fallthru
        _
    $region6: #{tpu_custom_call.1} parent=1 // loop_footer
      %s22 = sadd.s32 1, %s18
    $region7: #{tpu_custom_call.1} parent=1 // loop_footer_branch
      %17 = sbr.rel target = $region3
    $region8: #{tpu_custom_call.1} parent=1 // loop_exit
      _
    %391 = vsyncpa [#allocation3], 1
    %s392 = scalar_lea.sflag [#allocation3], 1
    %393 = vsyncpa %s392, 1
    %394 = vsyncpa [#allocation6], 1
    %s395 = scalar_lea.sflag [#allocation6], 1
    %396 = vsyncpa %s395, 1
    %397 = vsyncpa [#allocation4], 1
    %s398 = scalar_lea.sflag [#allocation4], 1
    %399 = vsyncpa %s398, 1

</llo_original>
